<compile_context>
chip_gen: v5e
topology: v5e:2x2
jax: 0.10.0
libtpu: 0.0.40
codegen_flags: <defaults>
</compile_context>

<pallas_src>
import jax
import jax.numpy as jnp
from jax.experimental import pallas as pl
from jax.experimental.pallas import tpu as pltpu


_RESIDENT_WEIGHT_BYTES = 8 * 1024 * 1024  # keep whole weight in VMEM below this


def _round_up(x, m):
    return ((x + m - 1) // m) * m


def _cdiv(a, b):
    return (a + b - 1) // b


def _vmem_limit_bytes():
    """Generation-aware scoped-VMEM limit (v5e/v6e ~96 MiB, v7x ~48 MiB)."""
    try:
        cap = pltpu.get_tpu_info().vmem_capacity_bytes
    except Exception:
        cap = 64 * 1024 * 1024  # conservative fallback (v7x physical VMEM)
    return int(min(cap * 3 // 4, 110 * 1024 * 1024))


def _largest_aligned_divisor(total, cap, align=128):
    """Largest multiple of `align` that divides `total` and is <= cap.
    Falls back to `total` (full dim, always legal) if no such divisor."""
    if total <= cap:
        return total
    t = (cap // align) * align
    while t >= align:
        if total % t == 0:
            return t
        t -= align
    return total


def _tile_vmem_bytes(tm, tn, tk, x_bytes, w_bytes, out_bytes):
    return (2 * tm * tk * x_bytes      # x tile, double-buffered
            + 2 * tk * tn * w_bytes    # weight tile, double-buffered
            + 2 * tn * 4               # bias (f32)
            + 2 * tm * tn * out_bytes  # output tile, double-buffered
            + tm * tn * 4)             # f32 accumulator scratch


def _fit_tiles(B, D_pad, C_pad, x_bytes, w_bytes, out_bytes, tm, tn, tk, budget):
    # >= 2 batch tiles when B allows it so the "parallel" batch axis spans
    # both v7x TensorCores; harmless on 1-TC chips (v5e/v6e).
    tm = min(tm, _round_up(_cdiv(B, 2), 8))

    # Whole weight resident in VMEM when small: constant block index means it
    # is DMA'd from HBM once and reused across every batch tile.
    if (D_pad * C_pad * w_bytes <= _RESIDENT_WEIGHT_BYTES
            and _tile_vmem_bytes(tm, C_pad, D_pad, x_bytes, w_bytes,
                                 out_bytes) <= budget):
        return tm, C_pad, D_pad

    tn = _largest_aligned_divisor(C_pad, tn)
    tk = _largest_aligned_divisor(D_pad, tk)
    while _tile_vmem_bytes(tm, tn, tk, x_bytes, w_bytes, out_bytes) > budget and tm > 8:
        tm = max(8, _round_up(tm // 2, 8))
    while (_tile_vmem_bytes(tm, tn, tk, x_bytes, w_bytes, out_bytes) > budget
           and tk > 128 and tk % 256 == 0):
        tk //= 2
    while (_tile_vmem_bytes(tm, tn, tk, x_bytes, w_bytes, out_bytes) > budget
           and tn > 128 and tn % 256 == 0):
        tn //= 2
    return tm, tn, tk


def _linear_kernel(x_ref, w_ref, b_ref, o_ref, acc_ref):
    k = pl.program_id(2)

    # Init accumulator with the (broadcast) bias -> no epilogue add needed.
    @pl.when(k == 0)
    def _():
        acc_ref[...] = jnp.broadcast_to(
            b_ref[...].astype(jnp.float32), acc_ref.shape)

    # Single bf16 MXU pass (x cast to the weight dtype), f32 accumulation.
    acc_ref[...] += jnp.dot(
        x_ref[...].astype(w_ref.dtype), w_ref[...],
        preferred_element_type=jnp.float32)

    # Lane-dense store only on the last K step.
    @pl.when(k == pl.num_programs(2) - 1)
    def _():
        o_ref[...] = acc_ref[...].astype(o_ref.dtype)


def prepare_linear_params(weight, bias, *, param_dtype=jnp.bfloat16):
    """One-time (init-time) prep: transpose the PyTorch (C, D) weight to
    (D, C), zero-pad, and store in bf16 (f32 accumulation in-kernel keeps the
    math accurate).  C is padded to a multiple of 128 (lane-dense stores);
    D is padded to a multiple of 8 when the weight is small enough to stay
    VMEM-resident (so x usually needs no per-call padding), else to 128 so
    the contraction can be K-tiled.  Padded entries are zero -> exact logits."""
    C, D = weight.shape
    c_pad = _round_up(C, 128)
    w_bytes = jnp.dtype(param_dtype).itemsize
    if _round_up(D, 8) * c_pad * w_bytes <= _RESIDENT_WEIGHT_BYTES:
        d_pad = _round_up(D, 8)
    else:
        d_pad = _round_up(D, 128)
    wt = jnp.zeros((d_pad, c_pad), param_dtype)
    wt = wt.at[:D, :C].set(weight.T.astype(param_dtype))
    b2 = jnp.zeros((1, c_pad), jnp.float32).at[0, :C].set(bias.astype(jnp.float32))
    return wt, b2


def multinomial_logistic_regression(x, wt_pad, b_pad, num_classes,
                                    *, tm=256, tn=512, tk=1024):
    """x: (B, D); wt_pad: (D_pad, C_pad) pre-transposed+padded (bf16) weight;
    b_pad: (1, C_pad) f32 bias; returns logits (B, num_classes) in x.dtype."""
    B, D = x.shape
    D_pad, C_pad = wt_pad.shape

    x_bytes = jnp.dtype(x.dtype).itemsize
    w_bytes = jnp.dtype(wt_pad.dtype).itemsize
    out_bytes = x_bytes

    vmem_limit = _vmem_limit_bytes()
    budget = int(vmem_limit * 0.85)
    tm, tn, tk = _fit_tiles(B, D_pad, C_pad, x_bytes, w_bytes, out_bytes,
                            tm, tn, tk, budget)

    # Pad x only along axes that need it (jnp.pad, no full re-materialization
    # when shapes already line up).
    B_pad = _round_up(B, tm)
    pad_b, pad_d = B_pad - B, D_pad - D
    x_p = x if (pad_b == 0 and pad_d == 0) else jnp.pad(x, ((0, pad_b), (0, pad_d)))

    nb, nc, nk = B_pad // tm, C_pad // tn, D_pad // tk

    cost = pl.CostEstimate(
        flops=2 * B_pad * D_pad * C_pad,
        transcendentals=0,
        bytes_accessed=(B_pad * D_pad * x_bytes
                        + D_pad * C_pad * w_bytes
                        + B_pad * C_pad * out_bytes),
    )

    out = pl.pallas_call(
        _linear_kernel,
        out_shape=jax.ShapeDtypeStruct((B_pad, C_pad), x.dtype),
        grid_spec=pltpu.PrefetchScalarGridSpec(
            num_scalar_prefetch=0,
            grid=(nb, nc, nk),  # batch (parallel), classes (parallel), K (reduce)
            in_specs=[
                pl.BlockSpec((tm, tk), lambda i, j, k: (i, k)),   # x tile
                pl.BlockSpec((tk, tn), lambda i, j, k: (k, j)),   # weight tile
                pl.BlockSpec((1, tn), lambda i, j, k: (0, j)),    # bias tile
            ],
            out_specs=pl.BlockSpec((tm, tn), lambda i, j, k: (i, j)),
            scratch_shapes=[pltpu.VMEM((tm, tn), jnp.float32)],
        ),
        compiler_params=pltpu.CompilerParams(
            dimension_semantics=("parallel", "parallel", "arbitrary"),
            vmem_limit_bytes=vmem_limit),
        cost_estimate=cost,
    )(x_p, wt_pad, b_pad)

    return out[:B, :num_classes]


if __name__ == "__main__":
    # Deterministic synthetic setup (mimics nn.Linear(input_dim, num_classes)).
    batch, input_dim, num_classes = 8, 32, 16
    key = jax.random.PRNGKey(0)
    kx, kw, kb = jax.random.split(key, 3)

    x = jax.random.normal(kx, (batch, input_dim), dtype=jnp.float32)
    bound = 1.0 / float(input_dim) ** 0.5  # PyTorch default uniform init bound
    weight = jax.random.uniform(
        kw, (num_classes, input_dim), minval=-bound, maxval=bound,
        dtype=jnp.float32)
    bias = jax.random.uniform(
        kb, (num_classes,), minval=-bound, maxval=bound, dtype=jnp.float32)

    # One-time parameter prep (transpose + pad + bf16) — at "init", not per call.
    wt_pad, b_pad = prepare_linear_params(weight, bias)

    logits = multinomial_logistic_regression(x, wt_pad, b_pad, num_classes)
    jax.block_until_ready(logits)

    # Cross-check against plain JAX f32 reference; tolerance loosened for the
    # bf16 weight/input path (f32 accumulation keeps the error ~1e-3 here).
    ref = jnp.dot(x, weight.T) + bias
    assert logits.shape == (batch, num_classes)
    assert jnp.allclose(logits, ref, atol=5e-2, rtol=5e-2), float(
        jnp.max(jnp.abs(logits - ref)))
    print("KERNEL_OK")
</pallas_src>

<mosaic_0001>
module attributes {stable_mosaic.version = 11 : i64} {
  func.func @_linear_kernel(%arg0: i32, %arg1: i32, %arg2: i32, %arg3: memref<8x32xf32, #tpu.memory_space<vmem>>, %arg4: memref<32x128xbf16, #tpu.memory_space<vmem>>, %arg5: memref<1x128xf32, #tpu.memory_space<vmem>>, %arg6: memref<8x128xf32, #tpu.memory_space<vmem>>, %arg7: memref<8x128xf32, #tpu.memory_space<vmem>>) attributes {dimension_semantics = [#tpu.dimension_semantics<parallel>, #tpu.dimension_semantics<parallel>, #tpu.dimension_semantics<arbitrary>], iteration_bounds = array<i64: 1, 1, 1>, scalar_prefetch = 0 : i64, scratch_operands = 1 : i64, tpu.core_type = #tpu.core_type<tc>, window_params = [{transform_indices = @transform_0, window_bounds = array<i64: 8, 32>}, {transform_indices = @transform_1, window_bounds = array<i64: 32, 128>}, {transform_indices = @transform_2, window_bounds = array<i64: 1, 128>}, {transform_indices = @transform_3, window_bounds = array<i64: 8, 128>}]} {
    %c0_i32 = arith.constant 0 : i32
    %0 = arith.cmpi eq, %arg2, %c0_i32 : i32
    %1 = arith.extui %0 : i1 to i32
    %c0_i32_0 = arith.constant 0 : i32
    %2 = arith.cmpi ne, %1, %c0_i32_0 : i32
    scf.if %2 {
      %c0_10 = arith.constant 0 : index
      %c0_11 = arith.constant 0 : index
      %13 = vector.load %arg5[%c0_10, %c0_11] : memref<1x128xf32, #tpu.memory_space<vmem>>, vector<1x128xf32>
      %14 = vector.shape_cast %13 : vector<1x128xf32> to vector<1x128xf32>
      %15 = vector.broadcast %14 : vector<1x128xf32> to vector<8x128xf32>
      %c0_12 = arith.constant 0 : index
      %c0_13 = arith.constant 0 : index
      %16 = vector.load %arg7[%c0_12, %c0_13] : memref<8x128xf32, #tpu.memory_space<vmem>>, vector<8x128xf32>
      tpu.vector_store %arg7[%c0_12, %c0_13], %15 {strides = array<i32>} : memref<8x128xf32, #tpu.memory_space<vmem>>, vector<8x128xf32>,
    } else {
    }
    %c0 = arith.constant 0 : index
    %c0_1 = arith.constant 0 : index
    %3 = vector.load %arg7[%c0, %c0_1] : memref<8x128xf32, #tpu.memory_space<vmem>>, vector<8x128xf32>
    %c0_2 = arith.constant 0 : index
    %c0_3 = arith.constant 0 : index
    %4 = vector.load %arg3[%c0_2, %c0_3] : memref<8x32xf32, #tpu.memory_space<vmem>>, vector<8x32xf32>
    %5 = arith.truncf %4 : vector<8x32xf32> to vector<8x32xbf16>
    %c0_4 = arith.constant 0 : index
    %c0_5 = arith.constant 0 : index
    %6 = vector.load %arg4[%c0_4, %c0_5] : memref<32x128xbf16, #tpu.memory_space<vmem>>, vector<32x128xbf16>
    %cst = arith.constant dense<0.000000e+00> : vector<8x128xf32>
    %7 = tpu.matmul %5, %6, %cst {dimension_numbers = #tpu.dot_dimension_numbers<[1], [0], [0], [1], [0, 0, 1, 1], [], []>} : vector<8x32xbf16>, vector<32x128xbf16>, vector<8x128xf32> -> vector<8x128xf32>
    %8 = arith.addf %3, %7 : vector<8x128xf32>
    %c0_6 = arith.constant 0 : index
    %c0_7 = arith.constant 0 : index
    %9 = vector.load %arg7[%c0_6, %c0_7] : memref<8x128xf32, #tpu.memory_space<vmem>>, vector<8x128xf32>
    tpu.vector_store %arg7[%c0_6, %c0_7], %8 {strides = array<i32>} : memref<8x128xf32, #tpu.memory_space<vmem>>, vector<8x128xf32>,
    %c0_i32_8 = arith.constant 0 : i32
    %10 = arith.cmpi eq, %arg2, %c0_i32_8 : i32
    %11 = arith.extui %10 : i1 to i32
    %c0_i32_9 = arith.constant 0 : i32
    %12 = arith.cmpi ne, %11, %c0_i32_9 : i32
    scf.if %12 {
      %c0_10 = arith.constant 0 : index
      %c0_11 = arith.constant 0 : index
      %13 = vector.load %arg7[%c0_10, %c0_11] : memref<8x128xf32, #tpu.memory_space<vmem>>, vector<8x128xf32>
      %c0_12 = arith.constant 0 : index
      %c0_13 = arith.constant 0 : index
      %14 = vector.load %arg6[%c0_12, %c0_13] : memref<8x128xf32, #tpu.memory_space<vmem>>, vector<8x128xf32>
      tpu.vector_store %arg6[%c0_12, %c0_13], %13 {strides = array<i32>} : memref<8x128xf32, #tpu.memory_space<vmem>>, vector<8x128xf32>,
    } else {
    }
    return
  }
  func.func @transform_0(%arg0: i32, %arg1: i32, %arg2: i32) -> (i32, i32) {
    %c0_i32 = arith.constant 0 : i32
    return %arg0, %arg2 : i32, i32
  }
  func.func @transform_1(%arg0: i32, %arg1: i32, %arg2: i32) -> (i32, i32) {
    %c0_i32 = arith.constant 0 : i32
    return %arg2, %arg1 : i32, i32
  }
  func.func @transform_2(%arg0: i32, %arg1: i32, %arg2: i32) -> (i32, i32) {
    %c0_i32 = arith.constant 0 : i32
    %c0_i32_0 = arith.constant 0 : i32
    return %c0_i32, %arg1 : i32, i32
  }
  func.func @transform_3(%arg0: i32, %arg1: i32, %arg2: i32) -> (i32, i32) {
    %c0_i32 = arith.constant 0 : i32
    return %arg0, %arg1 : i32, i32
  }
}

</mosaic_0001>

<llo_original>
// kernel: tpu_custom_call.1
$region0: #{tpu_custom_call.1}
  #allocation0 [shape = 'u32[]', space=smem, size = 0x4, offset = 0x4, fixed_abs, tag = 'smem constant byte address 0x4 - core index']
  #allocation1 [shape = 'u32[72,128]{1,0:T(1,128)}', space=vmem, size = 0x9000, scoped, tag = 'internal scratch']
  #allocation2 [shape = 'f32[8,128]{1,0:T(8,128)}', space=vmem, size = 0x1000, scoped, tag = 'scratch operand']
  %s0 = inlined_call_operand.hbm [shape: f32[8,32], index: 0, kind: input, shape index: {}]
  %s1 = inlined_call_operand.hbm [shape: bf16[32,128], index: 1, kind: input, shape index: {}]
  %s2 = inlined_call_operand.vmem [shape: f32[1,128], index: 2, kind: input, shape index: {}]
  %s3 = inlined_call_operand.hbm [shape: f32[8,128], index: 3, kind: output, shape index: {}]
  %s4 = sld [smem:[#allocation0]]
  $region38: #{tpu_custom_call.1} parent=0
    _
  %s6 = ssub.s32 1, %s4
  %s7 = scalar_select 0, %s6, %s4
  $region1: #{tpu_custom_call.1} parent=0
    #allocation3 [shape = 'u8[4096]{0}', space=vmem, size = 0x1000, scoped, tag = 'input window, operand 0, single buffered']
    #allocation4 [shape = 's32[1]{0}', space=sflag, size = 0x4, scoped, tag = 'scoped memory for tpu_custom_call.1']
    #allocation5 [shape = 's32[1]{0}', space=sflag, size = 0x4, scoped, tag = 'scoped memory for tpu_custom_call.1']
    #allocation6 [shape = 'u8[8192]{0}', space=vmem, size = 0x2000, scoped, tag = 'input window, operand 1, single buffered']
    #allocation7 [shape = 's32[1]{0}', space=sflag, size = 0x4, scoped, tag = 'scoped memory for tpu_custom_call.1']
    #allocation8 [shape = 'u8[4096]{0}', space=vmem, size = 0x1000, scoped, tag = 'output window, operand 0, single buffered']
    %8 = vsyncpa [#allocation4], 0
    %9 = vsyncpa [#allocation7], 0
    %10 = vsyncpa [#allocation5], 0
    // Predicated region
    $region2: #{tpu_custom_call.1} parent=1 // pred_check
      _
    $region3: #{tpu_custom_call.1} parent=1 // pred_check_branch
      %12 = sbr.rel (0) target = $region5
    $region4: #{tpu_custom_call.1} parent=1 // pred_region
      %14 = vsyncadd [#allocation4], 0
      %s16 = sshll.u32 %s0, 4
      %s17 = int_to_ptr.hbm [resolvable:$true] %s16
      %s18 = sshll.u32 [#allocation3], 4
      %s19 = int_to_ptr.vmem [resolvable:$true] %s18
      %21 = dma.hbm_to_vmem [thread:$0]  %s17, 128, %s19, [#allocation4]
    $region5: #{tpu_custom_call.1} parent=1 // pred_fallthru
      _
    // Predicated region
    $region6: #{tpu_custom_call.1} parent=1 // pred_check
      _
    $region7: #{tpu_custom_call.1} parent=1 // pred_check_branch
      %23 = sbr.rel (0) target = $region9
    $region8: #{tpu_custom_call.1} parent=1 // pred_region
      %25 = vsyncadd [#allocation7], 0
      %s26 = sshll.u32 %s1, 4
      %s27 = int_to_ptr.hbm [resolvable:$true] %s26
      %s28 = sshll.u32 [#allocation6], 4
      %s29 = int_to_ptr.vmem [resolvable:$true] %s28
      %34 = dma.hbm_to_vmem [thread:$0]  %s27, 256, %s29, [#allocation7], 64, 64, 4
    $region9: #{tpu_custom_call.1} parent=1 // pred_fallthru
      _
    // Predicated region
    $region10: #{tpu_custom_call.1} parent=1 // pred_check
      _
    $region11: #{tpu_custom_call.1} parent=1 // pred_check_branch
      %36 = sbr.rel (0) target = $region13
    $region12: #{tpu_custom_call.1} parent=1 // pred_region
      _
    $region13: #{tpu_custom_call.1} parent=1 // pred_fallthru
      _
    // Predicated region
    $region14: #{tpu_custom_call.1} parent=1 // pred_check
      _
    $region15: #{tpu_custom_call.1} parent=1 // pred_check_branch
      %38 = sbr.rel (0) target = $region17
    $region16: #{tpu_custom_call.1} parent=1 // pred_region
      %40 = dma.done [#allocation4], 128
    $region17: #{tpu_custom_call.1} parent=1 // pred_fallthru
      _
    // Predicated region
    $region18: #{tpu_custom_call.1} parent=1 // pred_check
      _
    $region19: #{tpu_custom_call.1} parent=1 // pred_check_branch
      %42 = sbr.rel (0) target = $region21
    $region20: #{tpu_custom_call.1} parent=1 // pred_region
      %44 = dma.done [#allocation7], 256
    $region21: #{tpu_custom_call.1} parent=1 // pred_fallthru
      _
    %p46 = scmp.eq.s32.totalorder 0, 0
    // Predicated region
    $region22: #{tpu_custom_call.1} parent=1 // pred_check
      %p47 = pneg %p46
    $region23: #{tpu_custom_call.1} parent=1 // pred_check_branch
      %49 = sbr.rel (%p47) target = $region25
    $region24: #{tpu_custom_call.1} parent=1 // pred_region
      %v50 = vld [vmem:[%s2] sm:$0x1]
      %v52 = vperm.slane %v50, 0
      %54 = vst [vmem:[#allocation2] sm:$0xff] %v52
    $region25: #{tpu_custom_call.1} parent=1 // pred_fallthru
      _
    %v55 = vld [vmem:[#allocation2] sm:$0xff]
    %v56 = vld [vmem:[#allocation3] sm:$0xff]
    %v57 = vpack.c.bf16 %v56, %v56
    %v58 = vld [vmem:[#allocation6] sm:$0xf]
    %v59 = vld [vmem:[#allocation6 + $0x4] sm:$0xf]
    %v60 = vld [vmem:[#allocation6 + $0x8] sm:$0xf]
    %v61 = vld [vmem:[#allocation6 + $0xc] sm:$0xf]
    %v66 = vunpack.c.l.b16 %v58
    %v67 = vunpack.c.l.b16 %v59
    %v68 = vunpack.c.l.b16 %v60
    %v69 = vunpack.c.l.b16 %v61
    %v70 = vpack.c.b16 %v67, %v66
    %v71 = vpack.c.b16 %v69, %v68
    %vm74 = vcmask 261120
    %v76 = vsel %vm74, %v57, 0
    %78 = vmatpush.bf16.msra.mxu0 0
    %79 = vmatpush.bf16.msra.mxu0 0
    %80 = vmatpush.bf16.msra.mxu0 0
    %81 = vmatpush.bf16.msra.mxu0 0
    %82 = vmatpush.bf16.msra.mxu0 0
    %83 = vmatpush.bf16.msra.mxu0 0
    %84 = vmatpush.bf16.msra.mxu0 %v71
    %85 = vmatpush.bf16.msra.mxu0 %v70
    %86 = vmatmul.bf16.gmra.mxu0 %v76
    %v87 = vpop.f32.mrf.mxu0
    %v88 = vadd.f32 0.0, %v87
    %v89 = vpop.f32.mrf.mxu0
    %90 = vdwg.mxu0
    %v91 = vadd.f32 %v55, %v88
    %92 = vst [vmem:[#allocation2] sm:$0xff] %v91
    // Predicated region
    $region26: #{tpu_custom_call.1} parent=1 // pred_check
      %p93 = pneg %p46
    $region27: #{tpu_custom_call.1} parent=1 // pred_check_branch
      %95 = sbr.rel (%p93) target = $region29
    $region28: #{tpu_custom_call.1} parent=1 // pred_region
      %v96 = vld [vmem:[#allocation2] sm:$0xff]
      %97 = vst [vmem:[#allocation8] sm:$0xff] %v96
    $region29: #{tpu_custom_call.1} parent=1 // pred_fallthru
      _
    // Predicated region
    $region30: #{tpu_custom_call.1} parent=1 // pred_check
      _
    $region31: #{tpu_custom_call.1} parent=1 // pred_check_branch
      %99 = sbr.rel (0) target = $region33
    $region32: #{tpu_custom_call.1} parent=1 // pred_region
      %101 = vsyncadd [#allocation5], 0
      %s103 = sshll.u32 [#allocation8], 4
      %s104 = int_to_ptr.vmem [resolvable:$true] %s103
      %s105 = sshll.u32 %s3, 4
      %s106 = int_to_ptr.hbm [resolvable:$true] %s105
      %108 = dma.vmem_to_hbm [thread:$0]  %s104, 128, %s106, [#allocation5]
    $region33: #{tpu_custom_call.1} parent=1 // pred_fallthru
      _
    // Predicated region
    $region34: #{tpu_custom_call.1} parent=1 // pred_check
      _
    $region35: #{tpu_custom_call.1} parent=1 // pred_check_branch
      %110 = sbr.rel (0) target = $region37
    $region36: #{tpu_custom_call.1} parent=1 // pred_region
      %112 = dma.done [#allocation5], 128
    $region37: #{tpu_custom_call.1} parent=1 // pred_fallthru
      _
    %113 = vsyncpa [#allocation4], 1
    %114 = vsyncpa [#allocation7], 1
    %115 = vsyncpa [#allocation5], 1

</llo_original>
